<compile_context>
chip_gen: v5e
topology: v5e:2x2
jax: 0.10.0
libtpu: 0.0.40
codegen_flags: <defaults>
</compile_context>

<pallas_src>
import functools

import jax
import jax.numpy as jnp
from jax.experimental import pallas as pl
from jax.experimental.pallas import tpu as pltpu

LAMBDA_VAL = 0.4
EPS = 1e-8

_LANES = 128
_SUBLANES = 8


def _authenticity_kernel(orig_ref, aug_ref, out_ref, *, lambda_val, eps):
    # Whole (S, 128) tiles live in VMEM; three scalar reductions + one
    # scalar-broadcast multiply.  No full-vector normalization needed.
    x = orig_ref[...].astype(jnp.float32)
    y = aug_ref[...].astype(jnp.float32)

    sx = jnp.sum(x * x)    # ||x||^2
    sy = jnp.sum(y * y)    # ||y||^2
    sxy = jnp.sum(x * y)   # <x, y>

    # Matches reference semantics: (x/(||x||+eps)) . (y/(||y||+eps))
    denom = (jnp.sqrt(sx) + eps) * (jnp.sqrt(sy) + eps)
    cos_sim = sxy / denom
    auth_score = 1.0 - lambda_val * cos_sim

    out_ref[...] = (auth_score * y).astype(out_ref.dtype)


def authenticity_forward(attn_orig, attn_aug, lambda_val=LAMBDA_VAL, eps=EPS):
    """Pallas wrapper reproducing AuthenticityModule.forward semantics.

    Args:
      attn_orig: (P,) original attention weights.
      attn_aug:  (P,) augmented attention weights.
    Returns:
      (P,) aligned augmented attention weights (same dtype as attn_aug).
    """
    assert attn_orig.shape == attn_aug.shape and attn_orig.ndim == 1
    P = attn_orig.shape[0]
    out_dtype = attn_aug.dtype

    # Sublane-dense layout: reshape the (zero-)padded vector into rows of 128
    # lanes, with the row count rounded up to a multiple of 8 sublanes.
    n_rows = max(1, -(-P // _LANES))
    S = -(-n_rows // _SUBLANES) * _SUBLANES
    P_pad = S * _LANES

    def pad2d(v):
        # Keep native dtype; zero padding leaves norms / dot product exact.
        v = jnp.pad(v, (0, P_pad - P))
        return v.reshape(S, _LANES)

    orig_p = pad2d(attn_orig)
    aug_p = pad2d(attn_aug)

    kernel = functools.partial(
        _authenticity_kernel, lambda_val=lambda_val, eps=eps
    )

    out_padded = pl.pallas_call(
        kernel,
        out_shape=jax.ShapeDtypeStruct((S, _LANES), out_dtype),
        in_specs=[
            pl.BlockSpec(memory_space=pltpu.MemorySpace.VMEM),
            pl.BlockSpec(memory_space=pltpu.MemorySpace.VMEM),
        ],
        out_specs=pl.BlockSpec(memory_space=pltpu.MemorySpace.VMEM),
    )(orig_p, aug_p)

    return out_padded.reshape(P_pad)[:P]


def _reference(attn_orig, attn_aug, lambda_val=LAMBDA_VAL, eps=EPS):
    x = attn_orig.astype(jnp.float32)
    y = attn_aug.astype(jnp.float32)
    nx = x / (jnp.linalg.norm(x) + eps)
    ny = y / (jnp.linalg.norm(y) + eps)
    cos_sim = jnp.sum(nx * ny)
    return ((1.0 - lambda_val * cos_sim) * y).astype(attn_aug.dtype)


if __name__ == "__main__":
    # Small example: P = 8 attention weights per WSI (positive, softmaxed).
    P = 8
    key = jax.random.PRNGKey(0)
    k1, k2 = jax.random.split(key)
    attn_orig = jax.nn.softmax(jax.random.normal(k1, (P,), dtype=jnp.float32))
    attn_aug = jax.nn.softmax(jax.random.normal(k2, (P,), dtype=jnp.float32))

    aligned = authenticity_forward(attn_orig, attn_aug)
    aligned = jax.block_until_ready(aligned)

    ref = _reference(attn_orig, attn_aug)
    assert aligned.shape == (P,)
    assert aligned.dtype == attn_aug.dtype
    assert jnp.allclose(aligned, ref, atol=1e-5, rtol=1e-5)

    print("KERNEL_OK")
</pallas_src>

<mosaic_0001>
module attributes {stable_mosaic.version = 11 : i64} {
  func.func @_authenticity_kernel(%arg0: memref<8x128xf32, #tpu.memory_space<vmem>>, %arg1: memref<8x128xf32, #tpu.memory_space<vmem>>, %arg2: memref<8x128xf32, #tpu.memory_space<vmem>>) attributes {dimension_semantics = [], scalar_prefetch = 0 : i64, scratch_operands = 0 : i64, tpu.core_type = #tpu.core_type<tc>} {
    %c0 = arith.constant 0 : index
    %c0_0 = arith.constant 0 : index
    %0 = vector.load %arg0[%c0, %c0_0] : memref<8x128xf32, #tpu.memory_space<vmem>>, vector<8x128xf32>
    %c0_1 = arith.constant 0 : index
    %c0_2 = arith.constant 0 : index
    %1 = vector.load %arg1[%c0_1, %c0_2] : memref<8x128xf32, #tpu.memory_space<vmem>>, vector<8x128xf32>
    %2 = arith.mulf %0, %0 : vector<8x128xf32>
    %3 = vector.shape_cast %2 : vector<8x128xf32> to vector<1x8x128xf32>
    %cst = arith.constant dense<0.000000e+00> : vector<1xf32>
    %4 = vector.multi_reduction <add>, %3, %cst [1, 2] : vector<1x8x128xf32> to vector<1xf32>
    %5 = vector.shape_cast %4 : vector<1xf32> to vector<1x1x1xf32>
    %6 = vector.extract %5[0, 0, 0] : f32 from vector<1x1x1xf32>
    %7 = arith.mulf %1, %1 : vector<8x128xf32>
    %8 = vector.shape_cast %7 : vector<8x128xf32> to vector<1x8x128xf32>
    %cst_3 = arith.constant dense<0.000000e+00> : vector<1xf32>
    %9 = vector.multi_reduction <add>, %8, %cst_3 [1, 2] : vector<1x8x128xf32> to vector<1xf32>
    %10 = vector.shape_cast %9 : vector<1xf32> to vector<1x1x1xf32>
    %11 = vector.extract %10[0, 0, 0] : f32 from vector<1x1x1xf32>
    %12 = arith.mulf %0, %1 : vector<8x128xf32>
    %13 = vector.shape_cast %12 : vector<8x128xf32> to vector<1x8x128xf32>
    %cst_4 = arith.constant dense<0.000000e+00> : vector<1xf32>
    %14 = vector.multi_reduction <add>, %13, %cst_4 [1, 2] : vector<1x8x128xf32> to vector<1xf32>
    %15 = vector.shape_cast %14 : vector<1xf32> to vector<1x1x1xf32>
    %16 = vector.extract %15[0, 0, 0] : f32 from vector<1x1x1xf32>
    %17 = math.sqrt %6 : f32
    %cst_5 = arith.constant 9.99999993E-9 : f32
    %18 = arith.addf %17, %cst_5 : f32
    %19 = math.sqrt %11 : f32
    %cst_6 = arith.constant 9.99999993E-9 : f32
    %20 = arith.addf %19, %cst_6 : f32
    %21 = arith.mulf %18, %20 : f32
    %22 = arith.divf %16, %21 : f32
    %cst_7 = arith.constant 4.000000e-01 : f32
    %23 = arith.mulf %cst_7, %22 : f32
    %cst_8 = arith.constant 1.000000e+00 : f32
    %24 = arith.subf %cst_8, %23 : f32
    %25 = vector.broadcast %24 : f32 to vector<8x128xf32>
    %26 = arith.mulf %25, %1 : vector<8x128xf32>
    %c0_9 = arith.constant 0 : index
    %c0_10 = arith.constant 0 : index
    %27 = vector.load %arg2[%c0_9, %c0_10] : memref<8x128xf32, #tpu.memory_space<vmem>>, vector<8x128xf32>
    tpu.vector_store %arg2[%c0_9, %c0_10], %26 {strides = array<i32>} : memref<8x128xf32, #tpu.memory_space<vmem>>, vector<8x128xf32>,
    return
  }
}

</mosaic_0001>

<llo_original>
// kernel: tpu_custom_call.1
$region0: #{tpu_custom_call.1}
  #allocation0 [shape = 'u32[]', space=smem, size = 0x4, offset = 0x4, fixed_abs, tag = 'smem constant byte address 0x4 - core index']
  #allocation1 [shape = 'u32[72,128]{1,0:T(1,128)}', space=vmem, size = 0x9000, scoped, tag = 'internal scratch']
  %s0 = inlined_call_operand.hbm [shape: f32[8,128], index: 0, kind: input, shape index: {}]
  %s1 = inlined_call_operand.hbm [shape: f32[8,128], index: 1, kind: input, shape index: {}]
  %s2 = inlined_call_operand.hbm [shape: f32[8,128], index: 2, kind: output, shape index: {}]
  %s3 = sld [smem:[#allocation0]]
  $region26: #{tpu_custom_call.1} parent=0
    _
  %s5 = ssub.s32 1, %s3
  %s6 = scalar_select 0, %s5, %s3
  $region1: #{tpu_custom_call.1} parent=0
    #allocation2 [shape = 'u8[4096]{0}', space=vmem, size = 0x1000, scoped, tag = 'input window, operand 0, single buffered']
    #allocation3 [shape = 's32[1]{0}', space=sflag, size = 0x4, scoped, tag = 'scoped memory for tpu_custom_call.1']
    #allocation4 [shape = 's32[1]{0}', space=sflag, size = 0x4, scoped, tag = 'scoped memory for tpu_custom_call.1']
    #allocation5 [shape = 'u8[4096]{0}', space=vmem, size = 0x1000, scoped, tag = 'input window, operand 1, single buffered']
    #allocation6 [shape = 's32[1]{0}', space=sflag, size = 0x4, scoped, tag = 'scoped memory for tpu_custom_call.1']
    #allocation7 [shape = 'u8[4096]{0}', space=vmem, size = 0x1000, scoped, tag = 'output window, operand 0, single buffered']
    %7 = vsyncpa [#allocation3], 0
    %8 = vsyncpa [#allocation6], 0
    %9 = vsyncpa [#allocation4], 0
    // Predicated region
    $region2: #{tpu_custom_call.1} parent=1 // pred_check
      _
    $region3: #{tpu_custom_call.1} parent=1 // pred_check_branch
      %11 = sbr.rel (0) target = $region5
    $region4: #{tpu_custom_call.1} parent=1 // pred_region
      %13 = vsyncadd [#allocation3], 0
      %s15 = sshll.u32 %s0, 4
      %s16 = int_to_ptr.hbm [resolvable:$true] %s15
      %s17 = sshll.u32 [#allocation2], 4
      %s18 = int_to_ptr.vmem [resolvable:$true] %s17
      %20 = dma.hbm_to_vmem [thread:$0]  %s16, 128, %s18, [#allocation3]
    $region5: #{tpu_custom_call.1} parent=1 // pred_fallthru
      _
    // Predicated region
    $region6: #{tpu_custom_call.1} parent=1 // pred_check
      _
    $region7: #{tpu_custom_call.1} parent=1 // pred_check_branch
      %22 = sbr.rel (0) target = $region9
    $region8: #{tpu_custom_call.1} parent=1 // pred_region
      %24 = vsyncadd [#allocation6], 0
      %s26 = sshll.u32 %s1, 4
      %s27 = int_to_ptr.hbm [resolvable:$true] %s26
      %s28 = sshll.u32 [#allocation5], 4
      %s29 = int_to_ptr.vmem [resolvable:$true] %s28
      %31 = dma.hbm_to_vmem [thread:$0]  %s27, 128, %s29, [#allocation6]
    $region9: #{tpu_custom_call.1} parent=1 // pred_fallthru
      _
    // Predicated region
    $region10: #{tpu_custom_call.1} parent=1 // pred_check
      _
    $region11: #{tpu_custom_call.1} parent=1 // pred_check_branch
      %33 = sbr.rel (0) target = $region13
    $region12: #{tpu_custom_call.1} parent=1 // pred_region
      %35 = dma.done [#allocation3], 128
    $region13: #{tpu_custom_call.1} parent=1 // pred_fallthru
      _
    // Predicated region
    $region14: #{tpu_custom_call.1} parent=1 // pred_check
      _
    $region15: #{tpu_custom_call.1} parent=1 // pred_check_branch
      %37 = sbr.rel (0) target = $region17
    $region16: #{tpu_custom_call.1} parent=1 // pred_region
      %39 = dma.done [#allocation6], 128
    $region17: #{tpu_custom_call.1} parent=1 // pred_fallthru
      _
    %v40 = vld [vmem:[#allocation2] sm:$0xff]
    %v41 = vld [vmem:[#allocation5] sm:$0xff]
    %v42 = vmul.f32 %v40, %v40
    %43 = vadd.xlane.f32.xlu0 %v42
    %v44 = vpop.xlane.xlu0 %43
    %v45 = vrot.slane %v44, 4
    %v46 = vadd.f32 %v44, %v45
    %v47 = vrot.slane %v46, 2
    %v48 = vadd.f32 %v46, %v47
    %v49 = vrot.slane %v48, 1
    %v50 = vadd.f32 %v48, %v49
    %s51 = vtos %v50
    %v52 = vmul.f32 %v41, %v41
    %53 = vadd.xlane.f32.xlu0 %v52
    %v54 = vpop.xlane.xlu0 %53
    %v55 = vrot.slane %v54, 4
    %v56 = vadd.f32 %v54, %v55
    %v57 = vrot.slane %v56, 2
    %v58 = vadd.f32 %v56, %v57
    %v59 = vrot.slane %v58, 1
    %v60 = vadd.f32 %v58, %v59
    %s61 = vtos %v60
    %v62 = vmul.f32 %v40, %v41
    %63 = vadd.xlane.f32.xlu0 %v62
    %v64 = vpop.xlane.xlu0 %63
    %v65 = vrot.slane %v64, 4
    %v66 = vadd.f32 %v64, %v65
    %v67 = vrot.slane %v66, 2
    %v68 = vadd.f32 %v66, %v67
    %v69 = vrot.slane %v68, 1
    %v70 = vadd.f32 %v68, %v69
    %s71 = vtos %v70
    %v72 = vstv %s51
    %v73 = vrsqrt.pop %v72
    %v74 = vmul.f32 %v73, %v72
    %v75 = vmul.f32 %v74, %v73
    %v76 = vmul.f32 0.5, %v75
    %v77 = vsub.f32 1.5, %v76
    %v78 = vmul.f32 %v73, %v77
    %v79 = vmul.f32 %v72, %v78
    %vm80 = vcmp.eq.f32.partialorder %v72, inf
    %v81 = vsel %vm80, %v72, %v79
    %vm82 = vcmp.eq.f32.partialorder %v72, 0.0
    %v83 = vand.u32 %v72, 2147483648
    %v84 = vsel %vm82, %v83, %v81
    %s85 = vtos %v84
    %s86 = sadd.f32 %s85, 1e-08
    %v87 = vstv %s61
    %v88 = vrsqrt.pop %v87
    %v89 = vmul.f32 %v88, %v87
    %v90 = vmul.f32 %v89, %v88
    %v91 = vmul.f32 0.5, %v90
    %v92 = vsub.f32 1.5, %v91
    %v93 = vmul.f32 %v88, %v92
    %v94 = vmul.f32 %v87, %v93
    %vm95 = vcmp.eq.f32.partialorder %v87, inf
    %v96 = vsel %vm95, %v87, %v94
    %vm97 = vcmp.eq.f32.partialorder %v87, 0.0
    %v98 = vand.u32 %v87, 2147483648
    %v99 = vsel %vm97, %v98, %v96
    %s100 = vtos %v99
    %s101 = sadd.f32 %s100, 1e-08
    %s102 = smul.f32 %s86, %s101
    %v103 = vstv %s102
    %v104 = vrcp.pop %v103
    %v105 = vmul.f32 %v103, %v104
    %v106 = vsub.f32 1.0, %v105
    %v107 = vmul.f32 %v104, %v106
    %v108 = vadd.f32 %v104, %v107
    %vm109 = vweird.f32 %v103
    %vm110 = vweird.f32 %v104
    %vm111 = vmor %vm109, %vm110
    %v112 = vsel %vm111, %v104, %v108
    %v113 = vand.u32 2147483647, %v103
    %vm114 = vcmp.eq.f32.partialorder %v113, 8.507059e+37
    %v115 = vand.u32 %v103, 2147483648
    %v116 = vor.u32 1.1754944e-38, %v115
    %v117 = vsel %vm114, %v116, %v112
    %s118 = vtos %v117
    %s119 = smul.f32 %s71, %s118
    %s120 = smul.f32 %s119, 0.4
    %s121 = ssub.f32 1.0, %s120
    %v122 = vstv %s121
    %v123 = vmul.f32 %v122, %v41
    %124 = vst [vmem:[#allocation7] sm:$0xff] %v123
    // Predicated region
    $region18: #{tpu_custom_call.1} parent=1 // pred_check
      _
    $region19: #{tpu_custom_call.1} parent=1 // pred_check_branch
      %126 = sbr.rel (0) target = $region21
    $region20: #{tpu_custom_call.1} parent=1 // pred_region
      %128 = vsyncadd [#allocation4], 0
      %s130 = sshll.u32 [#allocation7], 4
      %s131 = int_to_ptr.vmem [resolvable:$true] %s130
      %s132 = sshll.u32 %s2, 4
      %s133 = int_to_ptr.hbm [resolvable:$true] %s132
      %135 = dma.vmem_to_hbm [thread:$0]  %s131, 128, %s133, [#allocation4]
    $region21: #{tpu_custom_call.1} parent=1 // pred_fallthru
      _
    // Predicated region
    $region22: #{tpu_custom_call.1} parent=1 // pred_check
      _
    $region23: #{tpu_custom_call.1} parent=1 // pred_check_branch
      %137 = sbr.rel (0) target = $region25
    $region24: #{tpu_custom_call.1} parent=1 // pred_region
      %139 = dma.done [#allocation4], 128
    $region25: #{tpu_custom_call.1} parent=1 // pred_fallthru
      _
    %140 = vsyncpa [#allocation3], 1
    %141 = vsyncpa [#allocation6], 1
    %142 = vsyncpa [#allocation4], 1

</llo_original>
